<compile_context>
chip_gen: v5e
topology: v5e:2x2
jax: 0.10.0
libtpu: 0.0.40
codegen_flags: <defaults>
</compile_context>

<pallas_src>
import jax
import jax.numpy as jnp
from jax.experimental import pallas as pl
from jax.experimental.pallas import tpu as pltpu


NEG_SLOPE = 0.01  # F.leaky_relu default negative_slope


def _leaky_relu(v):
    return jnp.where(v > 0, v, NEG_SLOPE * v)


def dest_pred_kernel(
    x1_ref, x2_ref,             # (tile_b, d1), (tile_b, d2)
    w1a_ref, w1b_ref, b1_ref,   # residual_net.linear1 split: (d1,128),(d2,128),(1,128)
    w2_ref, b2_ref,             # residual_net.linear2: (128,128), (1,128)
    w3_ref, b3_ref,             # residual_net.linear3: (128,128), (1,128)
    wi_ref, bi_ref,             # input2hid: (128,64), (1,64)
    wh_ref, bh_ref,             # hid2hid:   (64,32),  (1,32)
    wo_ref, bo_ref,             # hid2out:   (32,2),   (1,2)
    out_ref,                    # (tile_b, 2)
):
    cdt = w1a_ref.dtype         # MXU operand dtype (bf16); elementwise math stays f32
    x1 = x1_ref[...].astype(cdt)
    x2 = x2_ref[...].astype(cdt)

    # ---- ResidualNet (concat folded into a split first matmul) ----
    r = _leaky_relu(
        jnp.dot(x1, w1a_ref[...], preferred_element_type=jnp.float32)
        + jnp.dot(x2, w1b_ref[...], preferred_element_type=jnp.float32)
        + b1_ref[...]
    )
    h = _leaky_relu(
        jnp.dot(r.astype(cdt), w2_ref[...], preferred_element_type=jnp.float32)
        + b2_ref[...]
    )
    res_out = _leaky_relu(
        jnp.dot(h.astype(cdt), w3_ref[...], preferred_element_type=jnp.float32)
        + b3_ref[...]
        + r
    )

    # ---- prediction head ----
    out = _leaky_relu(
        jnp.dot(res_out.astype(cdt), wi_ref[...], preferred_element_type=jnp.float32)
        + bi_ref[...]
    )
    active_out = _leaky_relu(
        jnp.dot(out.astype(cdt), wh_ref[...], preferred_element_type=jnp.float32)
        + bh_ref[...]
    )
    # dropout(drop_prob=0) == identity
    result = (
        jnp.dot(active_out.astype(cdt), wo_ref[...], preferred_element_type=jnp.float32)
        + bo_ref[...]
    )
    out_ref[...] = result.astype(out_ref.dtype)


def destination_prediction(sptm_out, traj_semantic, params, *,
                           tile_b=256, compute_dtype=jnp.bfloat16):
    """Batch-tiled fused kernel.  Weights stay VMEM-resident; batch tiles pipeline."""
    B, d1 = sptm_out.shape
    d2 = traj_semantic.shape[1]

    # Tile size: at least 8 (sublane tiling), at most the padded batch.
    tile_b = max(8, min(tile_b, ((B + 7) // 8) * 8))
    n_tiles = pl.cdiv(B, tile_b)
    Bp = n_tiles * tile_b
    if Bp != B:
        pad = Bp - B
        sptm_out = jnp.pad(sptm_out, ((0, pad), (0, 0)))
        traj_semantic = jnp.pad(traj_semantic, ((0, pad), (0, 0)))

    # Split w1 so the concat becomes two partial matmuls inside the kernel.
    cast = lambda w: w.astype(compute_dtype)
    w1a = cast(params["w1"][:d1])
    w1b = cast(params["w1"][d1:])
    weights_biases = (
        w1a, w1b, params["b1"],
        cast(params["w2"]), params["b2"],
        cast(params["w3"]), params["b3"],
        cast(params["wi"]), params["bi"],
        cast(params["wh"]), params["bh"],
        cast(params["wo"]), params["bo"],
    )

    def resident(arr):
        nd = arr.ndim
        return pl.BlockSpec(arr.shape, lambda i, _nd=nd: (0,) * _nd)

    in_specs = [
        pl.BlockSpec((tile_b, d1), lambda i: (i, 0)),
        pl.BlockSpec((tile_b, d2), lambda i: (i, 0)),
    ] + [resident(a) for a in weights_biases]

    out_specs = pl.BlockSpec((tile_b, 2), lambda i: (i, 0))

    input_size = d1 + d2
    flops = 2 * Bp * (input_size * 128 + 128 * 128 * 2 + 128 * 64 + 64 * 32 + 32 * 2)
    bytes_accessed = (
        sptm_out.size * sptm_out.dtype.itemsize
        + traj_semantic.size * traj_semantic.dtype.itemsize
        + sum(a.size * a.dtype.itemsize for a in weights_biases)
        + Bp * 2 * 4
    )
    cost = pl.CostEstimate(flops=flops, transcendentals=0,
                           bytes_accessed=bytes_accessed)

    out = pl.pallas_call(
        dest_pred_kernel,
        out_shape=jax.ShapeDtypeStruct((Bp, 2), jnp.float32),
        grid_spec=pltpu.PrefetchScalarGridSpec(
            num_scalar_prefetch=0,
            grid=(n_tiles,),
            in_specs=in_specs,
            out_specs=out_specs,
        ),
        compiler_params=pltpu.CompilerParams(
            dimension_semantics=("parallel",),          # megacore-shard batch tiles
            vmem_limit_bytes=32 * 1024 * 1024,          # small kernel; safe everywhere
        ),
        cost_estimate=cost,
    )(sptm_out, traj_semantic, *weights_biases)

    return out[:B] if Bp != B else out


def init_params(key, input_size):
    """Deterministic synthetic parameters (PyTorch-style (out,in) weights, pre-transposed)."""
    def linear(k, fan_in, fan_out):
        kw, kb = jax.random.split(k)
        bound = 1.0 / (fan_in ** 0.5)
        w = jax.random.uniform(kw, (fan_out, fan_in), jnp.float32, -bound, bound)
        b = jax.random.uniform(kb, (fan_out,), jnp.float32, -bound, bound)
        return w.T, b.reshape(1, fan_out)  # (in,out), (1,out)

    keys = jax.random.split(key, 6)
    w1, b1 = linear(keys[0], input_size, 128)   # residual_net.linear1
    w2, b2 = linear(keys[1], 128, 128)          # residual_net.linear2
    w3, b3 = linear(keys[2], 128, 128)          # residual_net.linear3
    wi, bi = linear(keys[3], 128, 64)           # input2hid
    wh, bh = linear(keys[4], 64, 32)            # hid2hid
    wo, bo = linear(keys[5], 32, 2)             # hid2out
    return dict(w1=w1, b1=b1, w2=w2, b2=b2, w3=w3, b3=b3,
                wi=wi, bi=bi, wh=wh, bh=bh, wo=wo, bo=bo)


def reference_forward(sptm_out, traj_semantic, p, compute_dtype=jnp.bfloat16):
    """Pure-JAX reference with the same bf16-operand / f32-accum matmul precision."""
    cdt = compute_dtype
    mm = lambda a, w: jnp.dot(a.astype(cdt), w.astype(cdt),
                              preferred_element_type=jnp.float32)
    lrelu = lambda v: jnp.where(v > 0, v, NEG_SLOPE * v)
    x = jnp.concatenate((sptm_out, traj_semantic), axis=1)
    r = lrelu(mm(x, p["w1"]) + p["b1"])
    h = lrelu(mm(r, p["w2"]) + p["b2"])
    res = lrelu(mm(h, p["w3"]) + p["b3"] + r)
    out = lrelu(mm(res, p["wi"]) + p["bi"])
    act = lrelu(mm(out, p["wh"]) + p["bh"])
    return mm(act, p["wo"]) + p["bo"]


if __name__ == "__main__":
    key = jax.random.PRNGKey(0)
    k_sptm, k_traj, k_param = jax.random.split(key, 3)

    SPTM_DIM = 96          # e.g. LSTM hidden output
    TRAJ_DIM = 32          # trajectory semantic features
    INPUT_SIZE = SPTM_DIM + TRAJ_DIM  # 128 -> ResidualNet input
    params = init_params(k_param, INPUT_SIZE)

    # Case 1: small, tile-aligned batch (single tile).
    B = 8
    sptm_out = jax.random.normal(k_sptm, (B, SPTM_DIM), jnp.float32)
    traj_semantic = jax.random.normal(k_traj, (B, TRAJ_DIM), jnp.float32)
    result = jax.block_until_ready(
        destination_prediction(sptm_out, traj_semantic, params))
    ref = reference_forward(sptm_out, traj_semantic, params)
    assert result.shape == (B, 2)
    assert jnp.allclose(result, ref, atol=5e-3, rtol=5e-3), "mismatch vs reference (B=8)"

    # Case 2: non-multiple batch exercises the padding + multi-tile path.
    B2 = 13
    k2a, k2b = jax.random.split(jax.random.PRNGKey(1))
    s2 = jax.random.normal(k2a, (B2, SPTM_DIM), jnp.float32)
    t2 = jax.random.normal(k2b, (B2, TRAJ_DIM), jnp.float32)
    r2 = jax.block_until_ready(
        destination_prediction(s2, t2, params, tile_b=8))
    ref2 = reference_forward(s2, t2, params)
    assert r2.shape == (B2, 2)
    assert jnp.allclose(r2, ref2, atol=5e-3, rtol=5e-3), "mismatch vs reference (B=13)"

    print("KERNEL_OK")
</pallas_src>

<mosaic_0001>
module attributes {stable_mosaic.version = 11 : i64} {
  func.func @dest_pred_kernel(%arg0: i32, %arg1: memref<8x96xf32, #tpu.memory_space<vmem>>, %arg2: memref<8x32xf32, #tpu.memory_space<vmem>>, %arg3: memref<96x128xbf16, #tpu.memory_space<vmem>>, %arg4: memref<32x128xbf16, #tpu.memory_space<vmem>>, %arg5: memref<1x128xf32, #tpu.memory_space<vmem>>, %arg6: memref<128x128xbf16, #tpu.memory_space<vmem>>, %arg7: memref<1x128xf32, #tpu.memory_space<vmem>>, %arg8: memref<128x128xbf16, #tpu.memory_space<vmem>>, %arg9: memref<1x128xf32, #tpu.memory_space<vmem>>, %arg10: memref<128x64xbf16, #tpu.memory_space<vmem>>, %arg11: memref<1x64xf32, #tpu.memory_space<vmem>>, %arg12: memref<64x32xbf16, #tpu.memory_space<vmem>>, %arg13: memref<1x32xf32, #tpu.memory_space<vmem>>, %arg14: memref<32x2xbf16, #tpu.memory_space<vmem>>, %arg15: memref<1x2xf32, #tpu.memory_space<vmem>>, %arg16: memref<8x2xf32, #tpu.memory_space<vmem>>) attributes {dimension_semantics = [#tpu.dimension_semantics<parallel>], iteration_bounds = array<i64: 1>, scalar_prefetch = 0 : i64, scratch_operands = 0 : i64, tpu.core_type = #tpu.core_type<tc>, window_params = [{transform_indices = @transform_0, window_bounds = array<i64: 8, 96>}, {transform_indices = @transform_1, window_bounds = array<i64: 8, 32>}, {pipeline_mode = #tpu.pipeline_mode<synchronous>, transform_indices = @transform_2, window_bounds = array<i64: 96, 128>}, {pipeline_mode = #tpu.pipeline_mode<synchronous>, transform_indices = @transform_3, window_bounds = array<i64: 32, 128>}, {pipeline_mode = #tpu.pipeline_mode<synchronous>, transform_indices = @transform_4, window_bounds = array<i64: 1, 128>}, {pipeline_mode = #tpu.pipeline_mode<synchronous>, transform_indices = @transform_5, window_bounds = array<i64: 128, 128>}, {pipeline_mode = #tpu.pipeline_mode<synchronous>, transform_indices = @transform_6, window_bounds = array<i64: 1, 128>}, {pipeline_mode = #tpu.pipeline_mode<synchronous>, transform_indices = @transform_7, window_bounds = array<i64: 128, 128>}, {pipeline_mode = #tpu.pipeline_mode<synchronous>, transform_indices = @transform_8, window_bounds = array<i64: 1, 128>}, {pipeline_mode = #tpu.pipeline_mode<synchronous>, transform_indices = @transform_9, window_bounds = array<i64: 128, 64>}, {pipeline_mode = #tpu.pipeline_mode<synchronous>, transform_indices = @transform_10, window_bounds = array<i64: 1, 64>}, {pipeline_mode = #tpu.pipeline_mode<synchronous>, transform_indices = @transform_11, window_bounds = array<i64: 64, 32>}, {pipeline_mode = #tpu.pipeline_mode<synchronous>, transform_indices = @transform_12, window_bounds = array<i64: 1, 32>}, {pipeline_mode = #tpu.pipeline_mode<synchronous>, transform_indices = @transform_13, window_bounds = array<i64: 32, 2>}, {pipeline_mode = #tpu.pipeline_mode<synchronous>, transform_indices = @transform_14, window_bounds = array<i64: 1, 2>}, {transform_indices = @transform_15, window_bounds = array<i64: 8, 2>}]} {
    %c0 = arith.constant 0 : index
    %c0_0 = arith.constant 0 : index
    %0 = vector.load %arg1[%c0, %c0_0] : memref<8x96xf32, #tpu.memory_space<vmem>>, vector<8x96xf32>
    %1 = arith.truncf %0 : vector<8x96xf32> to vector<8x96xbf16>
    %c0_1 = arith.constant 0 : index
    %c0_2 = arith.constant 0 : index
    %2 = vector.load %arg2[%c0_1, %c0_2] : memref<8x32xf32, #tpu.memory_space<vmem>>, vector<8x32xf32>
    %3 = arith.truncf %2 : vector<8x32xf32> to vector<8x32xbf16>
    %c0_3 = arith.constant 0 : index
    %c0_4 = arith.constant 0 : index
    %4 = vector.load %arg3[%c0_3, %c0_4] : memref<96x128xbf16, #tpu.memory_space<vmem>>, vector<96x128xbf16>
    %cst = arith.constant dense<0.000000e+00> : vector<8x128xf32>
    %5 = tpu.matmul %1, %4, %cst {dimension_numbers = #tpu.dot_dimension_numbers<[1], [0], [0], [1], [0, 0, 1, 1], [], []>} : vector<8x96xbf16>, vector<96x128xbf16>, vector<8x128xf32> -> vector<8x128xf32>
    %c0_5 = arith.constant 0 : index
    %c0_6 = arith.constant 0 : index
    %6 = vector.load %arg4[%c0_5, %c0_6] : memref<32x128xbf16, #tpu.memory_space<vmem>>, vector<32x128xbf16>
    %cst_7 = arith.constant dense<0.000000e+00> : vector<8x128xf32>
    %7 = tpu.matmul %3, %6, %cst_7 {dimension_numbers = #tpu.dot_dimension_numbers<[1], [0], [0], [1], [0, 0, 1, 1], [], []>} : vector<8x32xbf16>, vector<32x128xbf16>, vector<8x128xf32> -> vector<8x128xf32>
    %8 = arith.addf %5, %7 : vector<8x128xf32>
    %c0_8 = arith.constant 0 : index
    %c0_9 = arith.constant 0 : index
    %9 = vector.load %arg5[%c0_8, %c0_9] : memref<1x128xf32, #tpu.memory_space<vmem>>, vector<1x128xf32>
    %10 = vector.broadcast %9 : vector<1x128xf32> to vector<8x128xf32>
    %11 = arith.addf %8, %10 : vector<8x128xf32>
    %cst_10 = arith.constant 0.000000e+00 : f32
    %12 = vector.broadcast %cst_10 : f32 to vector<8x128xf32>
    %13 = arith.cmpf ogt, %11, %12 : vector<8x128xf32>
    %cst_11 = arith.constant 0.00999999977 : f32
    %14 = vector.broadcast %cst_11 : f32 to vector<8x128xf32>
    %15 = arith.mulf %14, %11 : vector<8x128xf32>
    %16 = arith.select %13, %11, %15 : vector<8x128xi1>, vector<8x128xf32>
    %17 = arith.truncf %16 : vector<8x128xf32> to vector<8x128xbf16>
    %c0_12 = arith.constant 0 : index
    %c0_13 = arith.constant 0 : index
    %18 = vector.load %arg6[%c0_12, %c0_13] : memref<128x128xbf16, #tpu.memory_space<vmem>>, vector<128x128xbf16>
    %cst_14 = arith.constant dense<0.000000e+00> : vector<8x128xf32>
    %19 = tpu.matmul %17, %18, %cst_14 {dimension_numbers = #tpu.dot_dimension_numbers<[1], [0], [0], [1], [0, 0, 1, 1], [], []>} : vector<8x128xbf16>, vector<128x128xbf16>, vector<8x128xf32> -> vector<8x128xf32>
    %c0_15 = arith.constant 0 : index
    %c0_16 = arith.constant 0 : index
    %20 = vector.load %arg7[%c0_15, %c0_16] : memref<1x128xf32, #tpu.memory_space<vmem>>, vector<1x128xf32>
    %21 = vector.broadcast %20 : vector<1x128xf32> to vector<8x128xf32>
    %22 = arith.addf %19, %21 : vector<8x128xf32>
    %cst_17 = arith.constant 0.000000e+00 : f32
    %23 = vector.broadcast %cst_17 : f32 to vector<8x128xf32>
    %24 = arith.cmpf ogt, %22, %23 : vector<8x128xf32>
    %cst_18 = arith.constant 0.00999999977 : f32
    %25 = vector.broadcast %cst_18 : f32 to vector<8x128xf32>
    %26 = arith.mulf %25, %22 : vector<8x128xf32>
    %27 = arith.select %24, %22, %26 : vector<8x128xi1>, vector<8x128xf32>
    %28 = arith.truncf %27 : vector<8x128xf32> to vector<8x128xbf16>
    %c0_19 = arith.constant 0 : index
    %c0_20 = arith.constant 0 : index
    %29 = vector.load %arg8[%c0_19, %c0_20] : memref<128x128xbf16, #tpu.memory_space<vmem>>, vector<128x128xbf16>
    %cst_21 = arith.constant dense<0.000000e+00> : vector<8x128xf32>
    %30 = tpu.matmul %28, %29, %cst_21 {dimension_numbers = #tpu.dot_dimension_numbers<[1], [0], [0], [1], [0, 0, 1, 1], [], []>} : vector<8x128xbf16>, vector<128x128xbf16>, vector<8x128xf32> -> vector<8x128xf32>
    %c0_22 = arith.constant 0 : index
    %c0_23 = arith.constant 0 : index
    %31 = vector.load %arg9[%c0_22, %c0_23] : memref<1x128xf32, #tpu.memory_space<vmem>>, vector<1x128xf32>
    %32 = vector.broadcast %31 : vector<1x128xf32> to vector<8x128xf32>
    %33 = arith.addf %30, %32 : vector<8x128xf32>
    %34 = arith.addf %33, %16 : vector<8x128xf32>
    %cst_24 = arith.constant 0.000000e+00 : f32
    %35 = vector.broadcast %cst_24 : f32 to vector<8x128xf32>
    %36 = arith.cmpf ogt, %34, %35 : vector<8x128xf32>
    %cst_25 = arith.constant 0.00999999977 : f32
    %37 = vector.broadcast %cst_25 : f32 to vector<8x128xf32>
    %38 = arith.mulf %37, %34 : vector<8x128xf32>
    %39 = arith.select %36, %34, %38 : vector<8x128xi1>, vector<8x128xf32>
    %40 = arith.truncf %39 : vector<8x128xf32> to vector<8x128xbf16>
    %c0_26 = arith.constant 0 : index
    %c0_27 = arith.constant 0 : index
    %41 = vector.load %arg10[%c0_26, %c0_27] : memref<128x64xbf16, #tpu.memory_space<vmem>>, vector<128x64xbf16>
    %cst_28 = arith.constant dense<0.000000e+00> : vector<8x64xf32>
    %42 = tpu.matmul %40, %41, %cst_28 {dimension_numbers = #tpu.dot_dimension_numbers<[1], [0], [0], [1], [0, 0, 1, 1], [], []>} : vector<8x128xbf16>, vector<128x64xbf16>, vector<8x64xf32> -> vector<8x64xf32>
    %c0_29 = arith.constant 0 : index
    %c0_30 = arith.constant 0 : index
    %43 = vector.load %arg11[%c0_29, %c0_30] : memref<1x64xf32, #tpu.memory_space<vmem>>, vector<1x64xf32>
    %44 = vector.broadcast %43 : vector<1x64xf32> to vector<8x64xf32>
    %45 = arith.addf %42, %44 : vector<8x64xf32>
    %cst_31 = arith.constant 0.000000e+00 : f32
    %46 = vector.broadcast %cst_31 : f32 to vector<8x64xf32>
    %47 = arith.cmpf ogt, %45, %46 : vector<8x64xf32>
    %cst_32 = arith.constant 0.00999999977 : f32
    %48 = vector.broadcast %cst_32 : f32 to vector<8x64xf32>
    %49 = arith.mulf %48, %45 : vector<8x64xf32>
    %50 = arith.select %47, %45, %49 : vector<8x64xi1>, vector<8x64xf32>
    %51 = arith.truncf %50 : vector<8x64xf32> to vector<8x64xbf16>
    %c0_33 = arith.constant 0 : index
    %c0_34 = arith.constant 0 : index
    %52 = vector.load %arg12[%c0_33, %c0_34] : memref<64x32xbf16, #tpu.memory_space<vmem>>, vector<64x32xbf16>
    %cst_35 = arith.constant dense<0.000000e+00> : vector<8x32xf32>
    %53 = tpu.matmul %51, %52, %cst_35 {dimension_numbers = #tpu.dot_dimension_numbers<[1], [0], [0], [1], [0, 0, 1, 1], [], []>} : vector<8x64xbf16>, vector<64x32xbf16>, vector<8x32xf32> -> vector<8x32xf32>
    %c0_36 = arith.constant 0 : index
    %c0_37 = arith.constant 0 : index
    %54 = vector.load %arg13[%c0_36, %c0_37] : memref<1x32xf32, #tpu.memory_space<vmem>>, vector<1x32xf32>
    %55 = vector.broadcast %54 : vector<1x32xf32> to vector<8x32xf32>
    %56 = arith.addf %53, %55 : vector<8x32xf32>
    %cst_38 = arith.constant 0.000000e+00 : f32
    %57 = vector.broadcast %cst_38 : f32 to vector<8x32xf32>
    %58 = arith.cmpf ogt, %56, %57 : vector<8x32xf32>
    %cst_39 = arith.constant 0.00999999977 : f32
    %59 = vector.broadcast %cst_39 : f32 to vector<8x32xf32>
    %60 = arith.mulf %59, %56 : vector<8x32xf32>
    %61 = arith.select %58, %56, %60 : vector<8x32xi1>, vector<8x32xf32>
    %62 = arith.truncf %61 : vector<8x32xf32> to vector<8x32xbf16>
    %c0_40 = arith.constant 0 : index
    %c0_41 = arith.constant 0 : index
    %63 = vector.load %arg14[%c0_40, %c0_41] : memref<32x2xbf16, #tpu.memory_space<vmem>>, vector<32x2xbf16>
    %cst_42 = arith.constant dense<0.000000e+00> : vector<8x2xf32>
    %64 = tpu.matmul %62, %63, %cst_42 {dimension_numbers = #tpu.dot_dimension_numbers<[1], [0], [0], [1], [0, 0, 1, 1], [], []>} : vector<8x32xbf16>, vector<32x2xbf16>, vector<8x2xf32> -> vector<8x2xf32>
    %c0_43 = arith.constant 0 : index
    %c0_44 = arith.constant 0 : index
    %65 = vector.load %arg15[%c0_43, %c0_44] : memref<1x2xf32, #tpu.memory_space<vmem>>, vector<1x2xf32>
    %66 = vector.broadcast %65 : vector<1x2xf32> to vector<8x2xf32>
    %67 = arith.addf %64, %66 : vector<8x2xf32>
    %c0_45 = arith.constant 0 : index
    %c0_46 = arith.constant 0 : index
    %68 = vector.load %arg16[%c0_45, %c0_46] : memref<8x2xf32, #tpu.memory_space<vmem>>, vector<8x2xf32>
    tpu.vector_store %arg16[%c0_45, %c0_46], %67 {strides = array<i32>} : memref<8x2xf32, #tpu.memory_space<vmem>>, vector<8x2xf32>,
    return
  }
  func.func @transform_0(%arg0: i32) -> (i32, i32) {
    %c0_i32 = arith.constant 0 : i32
    %c0_i32_0 = arith.constant 0 : i32
    return %arg0, %c0_i32 : i32, i32
  }
  func.func @transform_1(%arg0: i32) -> (i32, i32) {
    %c0_i32 = arith.constant 0 : i32
    %c0_i32_0 = arith.constant 0 : i32
    return %arg0, %c0_i32 : i32, i32
  }
  func.func @transform_2(%arg0: i32) -> (i32, i32) {
    %c0_i32 = arith.constant 0 : i32
    %c0_i32_0 = arith.constant 0 : i32
    %c0_i32_1 = arith.constant 0 : i32
    return %c0_i32, %c0_i32_0 : i32, i32
  }
  func.func @transform_3(%arg0: i32) -> (i32, i32) {
    %c0_i32 = arith.constant 0 : i32
    %c0_i32_0 = arith.constant 0 : i32
    %c0_i32_1 = arith.constant 0 : i32
    return %c0_i32, %c0_i32_0 : i32, i32
  }
  func.func @transform_4(%arg0: i32) -> (i32, i32) {
    %c0_i32 = arith.constant 0 : i32
    %c0_i32_0 = arith.constant 0 : i32
    %c0_i32_1 = arith.constant 0 : i32
    return %c0_i32, %c0_i32_0 : i32, i32
  }
  func.func @transform_5(%arg0: i32) -> (i32, i32) {
    %c0_i32 = arith.constant 0 : i32
    %c0_i32_0 = arith.constant 0 : i32
    %c0_i32_1 = arith.constant 0 : i32
    return %c0_i32, %c0_i32_0 : i32, i32
  }
  func.func @transform_6(%arg0: i32) -> (i32, i32) {
    %c0_i32 = arith.constant 0 : i32
    %c0_i32_0 = arith.constant 0 : i32
    %c0_i32_1 = arith.constant 0 : i32
    return %c0_i32, %c0_i32_0 : i32, i32
  }
  func.func @transform_7(%arg0: i32) -> (i32, i32) {
    %c0_i32 = arith.constant 0 : i32
    %c0_i32_0 = arith.constant 0 : i32
    %c0_i32_1 = arith.constant 0 : i32
    return %c0_i32, %c0_i32_0 : i32, i32
  }
  func.func @transform_8(%arg0: i32) -> (i32, i32) {
    %c0_i32 = arith.constant 0 : i32
    %c0_i32_0 = arith.constant 0 : i32
    %c0_i32_1 = arith.constant 0 : i32
    return %c0_i32, %c0_i32_0 : i32, i32
  }
  func.func @transform_9(%arg0: i32) -> (i32, i32) {
    %c0_i32 = arith.constant 0 : i32
    %c0_i32_0 = arith.constant 0 : i32
    %c0_i32_1 = arith.constant 0 : i32
    return %c0_i32, %c0_i32_0 : i32, i32
  }
  func.func @transform_10(%arg0: i32) -> (i32, i32) {
    %c0_i32 = arith.constant 0 : i32
    %c0_i32_0 = arith.constant 0 : i32
    %c0_i32_1 = arith.constant 0 : i32
    return %c0_i32, %c0_i32_0 : i32, i32
  }
  func.func @transform_11(%arg0: i32) -> (i32, i32) {
    %c0_i32 = arith.constant 0 : i32
    %c0_i32_0 = arith.constant 0 : i32
    %c0_i32_1 = arith.constant 0 : i32
    return %c0_i32, %c0_i32_0 : i32, i32
  }
  func.func @transform_12(%arg0: i32) -> (i32, i32) {
    %c0_i32 = arith.constant 0 : i32
    %c0_i32_0 = arith.constant 0 : i32
    %c0_i32_1 = arith.constant 0 : i32
    return %c0_i32, %c0_i32_0 : i32, i32
  }
  func.func @transform_13(%arg0: i32) -> (i32, i32) {
    %c0_i32 = arith.constant 0 : i32
    %c0_i32_0 = arith.constant 0 : i32
    %c0_i32_1 = arith.constant 0 : i32
    return %c0_i32, %c0_i32_0 : i32, i32
  }
  func.func @transform_14(%arg0: i32) -> (i32, i32) {
    %c0_i32 = arith.constant 0 : i32
    %c0_i32_0 = arith.constant 0 : i32
    %c0_i32_1 = arith.constant 0 : i32
    return %c0_i32, %c0_i32_0 : i32, i32
  }
  func.func @transform_15(%arg0: i32) -> (i32, i32) {
    %c0_i32 = arith.constant 0 : i32
    %c0_i32_0 = arith.constant 0 : i32
    return %arg0, %c0_i32 : i32, i32
  }
}

</mosaic_0001>

<llo_original>
// kernel: tpu_custom_call.1
$region0: #{tpu_custom_call.1}
  #allocation0 [shape = 'u32[]', space=smem, size = 0x4, offset = 0x4, fixed_abs, tag = 'smem constant byte address 0x4 - core index']
  #allocation1 [shape = 'u32[72,128]{1,0:T(1,128)}', space=vmem, size = 0x9000, scoped, tag = 'internal scratch']
  %s0 = inlined_call_operand.hbm [shape: f32[8,96], index: 0, kind: input, shape index: {}]
  %s1 = inlined_call_operand.hbm [shape: f32[8,32], index: 1, kind: input, shape index: {}]
  %s2 = inlined_call_operand.hbm [shape: bf16[96,128], index: 2, kind: input, shape index: {}]
  %s3 = inlined_call_operand.hbm [shape: bf16[32,128], index: 3, kind: input, shape index: {}]
  %s4 = inlined_call_operand.vmem [shape: f32[1,128], index: 4, kind: input, shape index: {}]
  %s5 = inlined_call_operand.vmem [shape: bf16[128,128], index: 5, kind: input, shape index: {}]
  %s6 = inlined_call_operand.vmem [shape: f32[1,128], index: 6, kind: input, shape index: {}]
  %s7 = inlined_call_operand.vmem [shape: bf16[128,128], index: 7, kind: input, shape index: {}]
  %s8 = inlined_call_operand.vmem [shape: f32[1,128], index: 8, kind: input, shape index: {}]
  %s9 = inlined_call_operand.vmem [shape: bf16[128,64], index: 9, kind: input, shape index: {}]
  %s10 = inlined_call_operand.vmem [shape: f32[1,64], index: 10, kind: input, shape index: {}]
  %s11 = inlined_call_operand.vmem [shape: bf16[64,32], index: 11, kind: input, shape index: {}]
  %s12 = inlined_call_operand.vmem [shape: f32[1,32], index: 12, kind: input, shape index: {}]
  %s13 = inlined_call_operand.vmem [shape: bf16[32,2], index: 13, kind: input, shape index: {}]
  %s14 = inlined_call_operand.vmem [shape: f32[1,2], index: 14, kind: input, shape index: {}]
  %s15 = inlined_call_operand.vmem [shape: f32[8,2], index: 15, kind: output, shape index: {}]
  %s16 = sld [smem:[#allocation0]]
  $region86: #{tpu_custom_call.1} parent=0
    _
  %s18 = ssub.s32 1, %s16
  %s19 = scalar_select 0, %s18, %s16
  $region1: #{tpu_custom_call.1} parent=0
    #allocation2 [shape = 'u8[4096]{0}', space=vmem, size = 0x1000, scoped, tag = 'input window, operand 0, single buffered']
    #allocation3 [shape = 's32[1]{0}', space=sflag, size = 0x4, scoped, tag = 'scoped memory for tpu_custom_call.1']
    #allocation4 [shape = 'u8[4096]{0}', space=vmem, size = 0x1000, scoped, tag = 'input window, operand 1, single buffered']
    #allocation5 [shape = 's32[1]{0}', space=sflag, size = 0x4, scoped, tag = 'scoped memory for tpu_custom_call.1']
    #allocation6 [shape = 'u8[24576]{0}', space=vmem, size = 0x6000, scoped, tag = 'input window, operand 2, single buffered']
    #allocation7 [shape = 'u8[8192]{0}', space=vmem, size = 0x2000, scoped, tag = 'input window, operand 3, single buffered']
    #allocation8 [shape = 's32[1]{0}', space=sflag, size = 0x4, scoped, tag = 'scoped memory for tpu_custom_call.1']
    %20 = vsyncpa [#allocation3], 0
    %21 = vsyncpa [#allocation5], 0
    %22 = vsyncpa [#allocation8], 0
    // Predicated region
    $region2: #{tpu_custom_call.1} parent=1 // pred_check
      _
    $region3: #{tpu_custom_call.1} parent=1 // pred_check_branch
      %24 = sbr.rel (0) target = $region5
    $region4: #{tpu_custom_call.1} parent=1 // pred_region
      %26 = vsyncadd [#allocation3], 0
      %s28 = sshll.u32 %s0, 4
      %s29 = int_to_ptr.hbm [resolvable:$true] %s28
      %s30 = sshll.u32 [#allocation2], 4
      %s31 = int_to_ptr.vmem [resolvable:$true] %s30
      %33 = dma.hbm_to_vmem [thread:$0]  %s29, 128, %s31, [#allocation3]
    $region5: #{tpu_custom_call.1} parent=1 // pred_fallthru
      _
    // Predicated region
    $region6: #{tpu_custom_call.1} parent=1 // pred_check
      _
    $region7: #{tpu_custom_call.1} parent=1 // pred_check_branch
      %35 = sbr.rel (0) target = $region9
    $region8: #{tpu_custom_call.1} parent=1 // pred_region
      %37 = vsyncadd [#allocation5], 0
      %s39 = sshll.u32 %s1, 4
      %s40 = int_to_ptr.hbm [resolvable:$true] %s39
      %s41 = sshll.u32 [#allocation4], 4
      %s42 = int_to_ptr.vmem [resolvable:$true] %s41
      %44 = dma.hbm_to_vmem [thread:$0]  %s40, 128, %s42, [#allocation5]
    $region9: #{tpu_custom_call.1} parent=1 // pred_fallthru
      _
    // Predicated region
    $region10: #{tpu_custom_call.1} parent=1 // pred_check
      _
    $region11: #{tpu_custom_call.1} parent=1 // pred_check_branch
      %46 = sbr.rel (0) target = $region13
    $region12: #{tpu_custom_call.1} parent=1 // pred_region
      %48 = vsyncadd [#allocation5], 0
      %s49 = sshll.u32 %s2, 4
      %s50 = int_to_ptr.hbm [resolvable:$true] %s49
      %s51 = sshll.u32 [#allocation6], 4
      %s52 = int_to_ptr.vmem [resolvable:$true] %s51
      %57 = dma.hbm_to_vmem [thread:$0]  %s50, 768, %s52, [#allocation5], 64, 64, 4
    $region13: #{tpu_custom_call.1} parent=1 // pred_fallthru
      _
    // Predicated region
    $region14: #{tpu_custom_call.1} parent=1 // pred_check
      _
    $region15: #{tpu_custom_call.1} parent=1 // pred_check_branch
      %59 = sbr.rel (0) target = $region17
    $region16: #{tpu_custom_call.1} parent=1 // pred_region
      %61 = vsyncadd [#allocation8], 0
      %s62 = sshll.u32 %s3, 4
      %s63 = int_to_ptr.hbm [resolvable:$true] %s62
      %s64 = sshll.u32 [#allocation7], 4
      %s65 = int_to_ptr.vmem [resolvable:$true] %s64
      %70 = dma.hbm_to_vmem [thread:$0]  %s63, 256, %s65, [#allocation8], 64, 64, 4
    $region17: #{tpu_custom_call.1} parent=1 // pred_fallthru
      _
    // Predicated region
    $region18: #{tpu_custom_call.1} parent=1 // pred_check
      _
    $region19: #{tpu_custom_call.1} parent=1 // pred_check_branch
      %72 = sbr.rel (0) target = $region21
    $region20: #{tpu_custom_call.1} parent=1 // pred_region
      _
    $region21: #{tpu_custom_call.1} parent=1 // pred_fallthru
      _
    // Predicated region
    $region22: #{tpu_custom_call.1} parent=1 // pred_check
      _
    $region23: #{tpu_custom_call.1} parent=1 // pred_check_branch
      %74 = sbr.rel (0) target = $region25
    $region24: #{tpu_custom_call.1} parent=1 // pred_region
      _
    $region25: #{tpu_custom_call.1} parent=1 // pred_fallthru
      _
    // Predicated region
    $region26: #{tpu_custom_call.1} parent=1 // pred_check
      _
    $region27: #{tpu_custom_call.1} parent=1 // pred_check_branch
      %76 = sbr.rel (0) target = $region29
    $region28: #{tpu_custom_call.1} parent=1 // pred_region
      _
    $region29: #{tpu_custom_call.1} parent=1 // pred_fallthru
      _
    // Predicated region
    $region30: #{tpu_custom_call.1} parent=1 // pred_check
      _
    $region31: #{tpu_custom_call.1} parent=1 // pred_check_branch
      %78 = sbr.rel (0) target = $region33
    $region32: #{tpu_custom_call.1} parent=1 // pred_region
      _
    $region33: #{tpu_custom_call.1} parent=1 // pred_fallthru
      _
    // Predicated region
    $region34: #{tpu_custom_call.1} parent=1 // pred_check
      _
    $region35: #{tpu_custom_call.1} parent=1 // pred_check_branch
      %80 = sbr.rel (0) target = $region37
    $region36: #{tpu_custom_call.1} parent=1 // pred_region
      _
    $region37: #{tpu_custom_call.1} parent=1 // pred_fallthru
      _
    // Predicated region
    $region38: #{tpu_custom_call.1} parent=1 // pred_check
      _
    $region39: #{tpu_custom_call.1} parent=1 // pred_check_branch
      %82 = sbr.rel (0) target = $region41
    $region40: #{tpu_custom_call.1} parent=1 // pred_region
      _
    $region41: #{tpu_custom_call.1} parent=1 // pred_fallthru
      _
    // Predicated region
    $region42: #{tpu_custom_call.1} parent=1 // pred_check
      _
    $region43: #{tpu_custom_call.1} parent=1 // pred_check_branch
      %84 = sbr.rel (0) target = $region45
    $region44: #{tpu_custom_call.1} parent=1 // pred_region
      _
    $region45: #{tpu_custom_call.1} parent=1 // pred_fallthru
      _
    // Predicated region
    $region46: #{tpu_custom_call.1} parent=1 // pred_check
      _
    $region47: #{tpu_custom_call.1} parent=1 // pred_check_branch
      %86 = sbr.rel (0) target = $region49
    $region48: #{tpu_custom_call.1} parent=1 // pred_region
      _
    $region49: #{tpu_custom_call.1} parent=1 // pred_fallthru
      _
    // Predicated region
    $region50: #{tpu_custom_call.1} parent=1 // pred_check
      _
    $region51: #{tpu_custom_call.1} parent=1 // pred_check_branch
      %88 = sbr.rel (0) target = $region53
    $region52: #{tpu_custom_call.1} parent=1 // pred_region
      _
    $region53: #{tpu_custom_call.1} parent=1 // pred_fallthru
      _
    // Predicated region
    $region54: #{tpu_custom_call.1} parent=1 // pred_check
      _
    $region55: #{tpu_custom_call.1} parent=1 // pred_check_branch
      %90 = sbr.rel (0) target = $region57
    $region56: #{tpu_custom_call.1} parent=1 // pred_region
      _
    $region57: #{tpu_custom_call.1} parent=1 // pred_fallthru
      _
    // Predicated region
    $region58: #{tpu_custom_call.1} parent=1 // pred_check
      _
    $region59: #{tpu_custom_call.1} parent=1 // pred_check_branch
      %92 = sbr.rel (0) target = $region61
    $region60: #{tpu_custom_call.1} parent=1 // pred_region
      _
    $region61: #{tpu_custom_call.1} parent=1 // pred_fallthru
      _
    // Predicated region
    $region62: #{tpu_custom_call.1} parent=1 // pred_check
      _
    $region63: #{tpu_custom_call.1} parent=1 // pred_check_branch
      %94 = sbr.rel (0) target = $region65
    $region64: #{tpu_custom_call.1} parent=1 // pred_region
      %96 = dma.done [#allocation3], 128
    $region65: #{tpu_custom_call.1} parent=1 // pred_fallthru
      _
    // Predicated region
    $region66: #{tpu_custom_call.1} parent=1 // pred_check
      _
    $region67: #{tpu_custom_call.1} parent=1 // pred_check_branch
      %98 = sbr.rel (0) target = $region69
    $region68: #{tpu_custom_call.1} parent=1 // pred_region
      %100 = dma.done [#allocation5], 128
    $region69: #{tpu_custom_call.1} parent=1 // pred_fallthru
      _
    // Predicated region
    $region70: #{tpu_custom_call.1} parent=1 // pred_check
      _
    $region71: #{tpu_custom_call.1} parent=1 // pred_check_branch
      %102 = sbr.rel (0) target = $region73
    $region72: #{tpu_custom_call.1} parent=1 // pred_region
      %104 = dma.done [#allocation5], 768
    $region73: #{tpu_custom_call.1} parent=1 // pred_fallthru
      _
    // Predicated region
    $region74: #{tpu_custom_call.1} parent=1 // pred_check
      _
    $region75: #{tpu_custom_call.1} parent=1 // pred_check_branch
      %106 = sbr.rel (0) target = $region77
    $region76: #{tpu_custom_call.1} parent=1 // pred_region
      %108 = dma.done [#allocation8], 256
    $region77: #{tpu_custom_call.1} parent=1 // pred_fallthru
      _
    %v110 = vld [vmem:[#allocation2] sm:$0xff]
    %v111 = vpack.c.bf16 %v110, %v110
    %v112 = vld [vmem:[#allocation4] sm:$0xff]
    %v113 = vpack.c.bf16 %v112, %v112
    %v114 = vld [vmem:[#allocation6] sm:$0xf]
    %v115 = vld [vmem:[#allocation6 + $0x4] sm:$0xf]
    %v116 = vld [vmem:[#allocation6 + $0x8] sm:$0xf]
    %v117 = vld [vmem:[#allocation6 + $0xc] sm:$0xf]
    %v118 = vld [vmem:[#allocation6 + $0x10] sm:$0xf]
    %v119 = vld [vmem:[#allocation6 + $0x14] sm:$0xf]
    %v120 = vld [vmem:[#allocation6 + $0x18] sm:$0xf]
    %v121 = vld [vmem:[#allocation6 + $0x1c] sm:$0xf]
    %v122 = vld [vmem:[#allocation6 + $0x20] sm:$0xf]
    %v123 = vld [vmem:[#allocation6 + $0x24] sm:$0xf]
    %v124 = vld [vmem:[#allocation6 + $0x28] sm:$0xf]
    %v125 = vld [vmem:[#allocation6 + $0x2c] sm:$0xf]
    %v126 = vld [vmem:[#allocation7] sm:$0xf]
    %v127 = vld [vmem:[#allocation7 + $0x4] sm:$0xf]
    %v128 = vld [vmem:[#allocation7 + $0x8] sm:$0xf]
    %v129 = vld [vmem:[#allocation7 + $0xc] sm:$0xf]
    %v134 = vunpack.c.l.b16 %v126
    %v135 = vunpack.c.l.b16 %v127
    %v136 = vunpack.c.l.b16 %v128
    %v137 = vunpack.c.l.b16 %v129
    %v138 = vpack.c.b16 %v135, %v134
    %v139 = vpack.c.b16 %v137, %v136
    %vm142 = vcmask 261120
    %v144 = vsel %vm142, %v113, 0
    %146 = vmatpush.bf16.msra.mxu0 0
    %147 = vmatpush.bf16.msra.mxu0 0
    %148 = vmatpush.bf16.msra.mxu0 0
    %149 = vmatpush.bf16.msra.mxu0 0
    %150 = vmatpush.bf16.msra.mxu0 0
    %151 = vmatpush.bf16.msra.mxu0 0
    %152 = vmatpush.bf16.msra.mxu0 %v139
    %153 = vmatpush.bf16.msra.mxu0 %v138
    %154 = vmatmul.bf16.gmra.mxu0 %v144
    %v155 = vpop.f32.mrf.mxu0
    %v156 = vadd.f32 0.0, %v155
    %v157 = vpop.f32.mrf.mxu0
    %158 = vdwg.mxu0
    %v171 = vunpack.c.l.b16 %v114
    %v172 = vunpack.c.l.b16 %v115
    %v173 = vunpack.c.l.b16 %v116
    %v174 = vunpack.c.l.b16 %v117
    %v175 = vunpack.c.l.b16 %v118
    %v176 = vunpack.c.l.b16 %v119
    %v177 = vunpack.c.l.b16 %v120
    %v178 = vunpack.c.l.b16 %v121
    %v179 = vunpack.c.l.b16 %v122
    %v180 = vunpack.c.l.b16 %v123
    %v181 = vunpack.c.l.b16 %v124
    %v182 = vunpack.c.l.b16 %v125
    %v183 = vpack.c.b16 %v172, %v171
    %v184 = vpack.c.b16 %v174, %v173
    %v185 = vpack.c.b16 %v176, %v175
    %v186 = vpack.c.b16 %v178, %v177
    %v187 = vpack.c.b16 %v180, %v179
    %v188 = vpack.c.b16 %v182, %v181
    %vm195 = vcmask 785408
    %v197 = vsel %vm195, %v111, 0
    %199 = vmatpush.bf16.msra.mxu0 0
    %200 = vmatpush.bf16.msra.mxu0 0
    %201 = vmatpush.bf16.msra.mxu0 %v188
    %202 = vmatpush.bf16.msra.mxu0 %v187
    %203 = vmatpush.bf16.msra.mxu0 %v186
    %204 = vmatpush.bf16.msra.mxu0 %v185
    %205 = vmatpush.bf16.msra.mxu0 %v184
    %206 = vmatpush.bf16.msra.mxu0 %v183
    %207 = vmatmul.bf16.gmra.mxu0 %v197
    %v208 = vpop.f32.mrf.mxu0
    %v209 = vadd.f32 %v156, %v208
    %v210 = vpop.f32.mrf.mxu0
    %211 = vdwg.mxu0
    %v212 = vld [vmem:[%s4] sm:$0x1]
    %v214 = vperm.slane %v212, 0
    %v216 = vadd.f32 %v209, %v214
    %vm217 = vcmp.gt.f32.partialorder %v216, 0.0
    %v218 = vmul.f32 %v216, 0.01
    %v219 = vsel %vm217, %v216, %v218
    %v220 = vpack.c.bf16 %v219, %v219
    %v221 = vld [vmem:[%s5] sm:$0xf]
    %v222 = vld [vmem:[%s5 + $0x4] sm:$0xf]
    %v223 = vld [vmem:[%s5 + $0x8] sm:$0xf]
    %v224 = vld [vmem:[%s5 + $0xc] sm:$0xf]
    %v225 = vld [vmem:[%s5 + $0x10] sm:$0xf]
    %v226 = vld [vmem:[%s5 + $0x14] sm:$0xf]
    %v227 = vld [vmem:[%s5 + $0x18] sm:$0xf]
    %v228 = vld [vmem:[%s5 + $0x1c] sm:$0xf]
    %v229 = vld [vmem:[%s5 + $0x20] sm:$0xf]
    %v230 = vld [vmem:[%s5 + $0x24] sm:$0xf]
    %v231 = vld [vmem:[%s5 + $0x28] sm:$0xf]
    %v232 = vld [vmem:[%s5 + $0x2c] sm:$0xf]
    %v233 = vld [vmem:[%s5 + $0x30] sm:$0xf]
    %v234 = vld [vmem:[%s5 + $0x34] sm:$0xf]
    %v235 = vld [vmem:[%s5 + $0x38] sm:$0xf]
    %v236 = vld [vmem:[%s5 + $0x3c] sm:$0xf]
    %v237 = vld [vmem:[%s6] sm:$0x1]
    %v239 = vperm.slane %v237, 0
    %v257 = vunpack.c.l.b16 %v221
    %v258 = vunpack.c.l.b16 %v222
    %v259 = vunpack.c.l.b16 %v223
    %v260 = vunpack.c.l.b16 %v224
    %v261 = vunpack.c.l.b16 %v225
    %v262 = vunpack.c.l.b16 %v226
    %v263 = vunpack.c.l.b16 %v227
    %v264 = vunpack.c.l.b16 %v228
    %v265 = vunpack.c.l.b16 %v229
    %v266 = vunpack.c.l.b16 %v230
    %v267 = vunpack.c.l.b16 %v231
    %v268 = vunpack.c.l.b16 %v232
    %v269 = vunpack.c.l.b16 %v233
    %v270 = vunpack.c.l.b16 %v234
    %v271 = vunpack.c.l.b16 %v235
    %v272 = vunpack.c.l.b16 %v236
    %v273 = vpack.c.b16 %v258, %v257
    %v274 = vpack.c.b16 %v260, %v259
    %v275 = vpack.c.b16 %v262, %v261
    %v276 = vpack.c.b16 %v264, %v263
    %v277 = vpack.c.b16 %v266, %v265
    %v278 = vpack.c.b16 %v268, %v267
    %v279 = vpack.c.b16 %v270, %v269
    %v280 = vpack.c.b16 %v272, %v271
    %289 = vmatpush.bf16.msra.mxu0 %v280
    %290 = vmatpush.bf16.msra.mxu0 %v279
    %291 = vmatpush.bf16.msra.mxu0 %v278
    %292 = vmatpush.bf16.msra.mxu0 %v277
    %293 = vmatpush.bf16.msra.mxu0 %v276
    %294 = vmatpush.bf16.msra.mxu0 %v275
    %295 = vmatpush.bf16.msra.mxu0 %v274
    %296 = vmatpush.bf16.msra.mxu0 %v273
    %297 = vmatmul.bf16.gmra.mxu0 %v220
    %v298 = vpop.f32.mrf.mxu0
    %v299 = vadd.f32 %v239, %v298
    %v300 = vpop.f32.mrf.mxu0
    %301 = vdwg.mxu0
    %vm302 = vcmp.gt.f32.partialorder %v299, 0.0
    %v303 = vmul.f32 %v299, 0.01
    %v304 = vsel %vm302, %v299, %v303
    %v305 = vpack.c.bf16 %v304, %v304
    %v306 = vld [vmem:[%s7] sm:$0xf]
    %v307 = vld [vmem:[%s7 + $0x4] sm:$0xf]
    %v308 = vld [vmem:[%s7 + $0x8] sm:$0xf]
    %v309 = vld [vmem:[%s7 + $0xc] sm:$0xf]
    %v310 = vld [vmem:[%s7 + $0x10] sm:$0xf]
    %v311 = vld [vmem:[%s7 + $0x14] sm:$0xf]
    %v312 = vld [vmem:[%s7 + $0x18] sm:$0xf]
    %v313 = vld [vmem:[%s7 + $0x1c] sm:$0xf]
    %v314 = vld [vmem:[%s7 + $0x20] sm:$0xf]
    %v315 = vld [vmem:[%s7 + $0x24] sm:$0xf]
    %v316 = vld [vmem:[%s7 + $0x28] sm:$0xf]
    %v317 = vld [vmem:[%s7 + $0x2c] sm:$0xf]
    %v318 = vld [vmem:[%s7 + $0x30] sm:$0xf]
    %v319 = vld [vmem:[%s7 + $0x34] sm:$0xf]
    %v320 = vld [vmem:[%s7 + $0x38] sm:$0xf]
    %v321 = vld [vmem:[%s7 + $0x3c] sm:$0xf]
    %v322 = vld [vmem:[%s8] sm:$0x1]
    %v324 = vperm.slane %v322, 0
    %v342 = vunpack.c.l.b16 %v306
    %v343 = vunpack.c.l.b16 %v307
    %v344 = vunpack.c.l.b16 %v308
    %v345 = vunpack.c.l.b16 %v309
    %v346 = vunpack.c.l.b16 %v310
    %v347 = vunpack.c.l.b16 %v311
    %v348 = vunpack.c.l.b16 %v312
    %v349 = vunpack.c.l.b16 %v313
    %v350 = vunpack.c.l.b16 %v314
    %v351 = vunpack.c.l.b16 %v315
    %v352 = vunpack.c.l.b16 %v316
    %v353 = vunpack.c.l.b16 %v317
    %v354 = vunpack.c.l.b16 %v318
    %v355 = vunpack.c.l.b16 %v319
    %v356 = vunpack.c.l.b16 %v320
    %v357 = vunpack.c.l.b16 %v321
    %v358 = vpack.c.b16 %v343, %v342
    %v359 = vpack.c.b16 %v345, %v344
    %v360 = vpack.c.b16 %v347, %v346
    %v361 = vpack.c.b16 %v349, %v348
    %v362 = vpack.c.b16 %v351, %v350
    %v363 = vpack.c.b16 %v353, %v352
    %v364 = vpack.c.b16 %v355, %v354
    %v365 = vpack.c.b16 %v357, %v356
    %374 = vmatpush.bf16.msra.mxu0 %v365
    %375 = vmatpush.bf16.msra.mxu0 %v364
    %376 = vmatpush.bf16.msra.mxu0 %v363
    %377 = vmatpush.bf16.msra.mxu0 %v362
    %378 = vmatpush.bf16.msra.mxu0 %v361
    %379 = vmatpush.bf16.msra.mxu0 %v360
    %380 = vmatpush.bf16.msra.mxu0 %v359
    %381 = vmatpush.bf16.msra.mxu0 %v358
    %382 = vmatmul.bf16.gmra.mxu0 %v305
    %v383 = vpop.f32.mrf.mxu0
    %v384 = vadd.f32 %v324, %v383
    %v385 = vpop.f32.mrf.mxu0
    %386 = vdwg.mxu0
    %v387 = vadd.f32 %v384, %v219
    %vm388 = vcmp.gt.f32.partialorder %v387, 0.0
    %v389 = vmul.f32 %v387, 0.01
    %v390 = vsel %vm388, %v387, %v389
    %v391 = vpack.c.bf16 %v390, %v390
    %v392 = vld [vmem:[%s9] sm:$0xf]
    %v393 = vld [vmem:[%s9 + $0x4] sm:$0xf]
    %v394 = vld [vmem:[%s9 + $0x8] sm:$0xf]
    %v395 = vld [vmem:[%s9 + $0xc] sm:$0xf]
    %v396 = vld [vmem:[%s9 + $0x10] sm:$0xf]
    %v397 = vld [vmem:[%s9 + $0x14] sm:$0xf]
    %v398 = vld [vmem:[%s9 + $0x18] sm:$0xf]
    %v399 = vld [vmem:[%s9 + $0x1c] sm:$0xf]
    %v400 = vld [vmem:[%s9 + $0x20] sm:$0xf]
    %v401 = vld [vmem:[%s9 + $0x24] sm:$0xf]
    %v402 = vld [vmem:[%s9 + $0x28] sm:$0xf]
    %v403 = vld [vmem:[%s9 + $0x2c] sm:$0xf]
    %v404 = vld [vmem:[%s9 + $0x30] sm:$0xf]
    %v405 = vld [vmem:[%s9 + $0x34] sm:$0xf]
    %v406 = vld [vmem:[%s9 + $0x38] sm:$0xf]
    %v407 = vld [vmem:[%s9 + $0x3c] sm:$0xf]
    %v408 = vld [vmem:[%s10] sm:$0x1]
    %v410 = vperm.slane %v408, 0
    %v428 = vunpack.c.l.b16 %v392
    %v429 = vunpack.c.l.b16 %v393
    %v430 = vunpack.c.l.b16 %v394
    %v431 = vunpack.c.l.b16 %v395
    %v432 = vunpack.c.l.b16 %v396
    %v433 = vunpack.c.l.b16 %v397
    %v434 = vunpack.c.l.b16 %v398
    %v435 = vunpack.c.l.b16 %v399
    %v436 = vunpack.c.l.b16 %v400
    %v437 = vunpack.c.l.b16 %v401
    %v438 = vunpack.c.l.b16 %v402
    %v439 = vunpack.c.l.b16 %v403
    %v440 = vunpack.c.l.b16 %v404
    %v441 = vunpack.c.l.b16 %v405
    %v442 = vunpack.c.l.b16 %v406
    %v443 = vunpack.c.l.b16 %v407
    %v444 = vpack.c.b16 %v429, %v428
    %v445 = vpack.c.b16 %v431, %v430
    %v446 = vpack.c.b16 %v433, %v432
    %v447 = vpack.c.b16 %v435, %v434
    %v448 = vpack.c.b16 %v437, %v436
    %v449 = vpack.c.b16 %v439, %v438
    %v450 = vpack.c.b16 %v441, %v440
    %v451 = vpack.c.b16 %v443, %v442
    %460 = vmatpush.bf16.msra.mxu0 %v451
    %461 = vmatpush.bf16.msra.mxu0 %v450
    %462 = vmatpush.bf16.msra.mxu0 %v449
    %463 = vmatpush.bf16.msra.mxu0 %v448
    %464 = vmatpush.bf16.msra.mxu0 %v447
    %465 = vmatpush.bf16.msra.mxu0 %v446
    %466 = vmatpush.bf16.msra.mxu0 %v445
    %467 = vmatpush.bf16.msra.mxu0 %v444
    %468 = vmatmul.bf16.gmra.mxu0 %v391
    %v469 = vpop.f32.mrf.mxu0
    %v470 = vadd.f32 %v410, %v469
    %v471 = vpop.f32.mrf.mxu0
    %472 = vdwg.mxu0
    %vm473 = vcmp.gt.f32.partialorder %v470, 0.0
    %v474 = vmul.f32 %v470, 0.01
    %v475 = vsel %vm473, %v470, %v474
    %v476 = vpack.c.bf16 %v475, %v475
    %v477 = vld [vmem:[%s11] sm:$0xf]
    %v478 = vld [vmem:[%s11 + $0x4] sm:$0xf]
    %v479 = vld [vmem:[%s11 + $0x8] sm:$0xf]
    %v480 = vld [vmem:[%s11 + $0xc] sm:$0xf]
    %v481 = vld [vmem:[%s11 + $0x10] sm:$0xf]
    %v482 = vld [vmem:[%s11 + $0x14] sm:$0xf]
    %v483 = vld [vmem:[%s11 + $0x18] sm:$0xf]
    %v484 = vld [vmem:[%s11 + $0x1c] sm:$0xf]
    %v485 = vld [vmem:[%s12] sm:$0x1]
    %v487 = vperm.slane %v485, 0
    %v497 = vunpack.c.l.b16 %v477
    %v498 = vunpack.c.l.b16 %v478
    %v499 = vunpack.c.l.b16 %v479
    %v500 = vunpack.c.l.b16 %v480
    %v501 = vunpack.c.l.b16 %v481
    %v502 = vunpack.c.l.b16 %v482
    %v503 = vunpack.c.l.b16 %v483
    %v504 = vunpack.c.l.b16 %v484
    %v505 = vpack.c.b16 %v498, %v497
    %v506 = vpack.c.b16 %v500, %v499
    %v507 = vpack.c.b16 %v502, %v501
    %v508 = vpack.c.b16 %v504, %v503
    %vm513 = vcmask 523264
    %v515 = vsel %vm513, %v476, 0
    %517 = vmatpush.bf16.msra.mxu0 0
    %518 = vmatpush.bf16.msra.mxu0 0
    %519 = vmatpush.bf16.msra.mxu0 0
    %520 = vmatpush.bf16.msra.mxu0 0
    %521 = vmatpush.bf16.msra.mxu0 %v508
    %522 = vmatpush.bf16.msra.mxu0 %v507
    %523 = vmatpush.bf16.msra.mxu0 %v506
    %524 = vmatpush.bf16.msra.mxu0 %v505
    %525 = vmatmul.bf16.gmra.mxu0 %v515
    %v526 = vpop.f32.mrf.mxu0
    %v527 = vadd.f32 %v487, %v526
    %v528 = vpop.f32.mrf.mxu0
    %529 = vdwg.mxu0
    %vm530 = vcmp.gt.f32.partialorder %v527, 0.0
    %v531 = vmul.f32 %v527, 0.01
    %v532 = vsel %vm530, %v527, %v531
    %v533 = vpack.c.bf16 %v532, %v532
    %v534 = vld [vmem:[%s13] sm:$0xf]
    %v535 = vld [vmem:[%s13 + $0x4] sm:$0xf]
    %v536 = vld [vmem:[%s13 + $0x8] sm:$0xf]
    %v537 = vld [vmem:[%s13 + $0xc] sm:$0xf]
    %v538 = vld [vmem:[%s14] sm:$0x1]
    %v540 = vperm.slane %v538, 0
    %v546 = vunpack.c.l.b16 %v534
    %v547 = vunpack.c.l.b16 %v535
    %v548 = vunpack.c.l.b16 %v536
    %v549 = vunpack.c.l.b16 %v537
    %v550 = vpack.c.b16 %v547, %v546
    %v551 = vpack.c.b16 %v549, %v548
    %v555 = vsel %vm142, %v533, 0
    %557 = vmatpush.bf16.msra.mxu0 0
    %558 = vmatpush.bf16.msra.mxu0 0
    %559 = vmatpush.bf16.msra.mxu0 0
    %560 = vmatpush.bf16.msra.mxu0 0
    %561 = vmatpush.bf16.msra.mxu0 0
    %562 = vmatpush.bf16.msra.mxu0 0
    %563 = vmatpush.bf16.msra.mxu0 %v551
    %564 = vmatpush.bf16.msra.mxu0 %v550
    %565 = vmatmul.bf16.gmra.mxu0 %v555
    %v566 = vpop.f32.mrf.mxu0
    %v567 = vadd.f32 %v540, %v566
    %v568 = vpop.f32.mrf.mxu0
    %569 = vdwg.mxu0
    %vm570 = vcmask 15360
    %571 = vst.msk [vmem:[%s15] sm:$0xff] %vm570, %v567
    // Predicated region
    $region78: #{tpu_custom_call.1} parent=1 // pred_check
      _
    $region79: #{tpu_custom_call.1} parent=1 // pred_check_branch
      %573 = sbr.rel (0) target = $region81
    $region80: #{tpu_custom_call.1} parent=1 // pred_region
      _
    $region81: #{tpu_custom_call.1} parent=1 // pred_fallthru
      _
    // Predicated region
    $region82: #{tpu_custom_call.1} parent=1 // pred_check
      _
    $region83: #{tpu_custom_call.1} parent=1 // pred_check_branch
      %575 = sbr.rel (0) target = $region85
    $region84: #{tpu_custom_call.1} parent=1 // pred_region
      _
    $region85: #{tpu_custom_call.1} parent=1 // pred_fallthru
      _
    %576 = vsyncpa [#allocation3], 1
    %577 = vsyncpa [#allocation5], 1
    %578 = vsyncpa [#allocation8], 1

</llo_original>
